<compile_context>
chip_gen: v5e
topology: v5e:2x2
jax: 0.10.0
libtpu: 0.0.40
codegen_flags: <defaults>
</compile_context>

<pallas_src>
import jax
import jax.numpy as jnp
from jax.experimental import pallas as pl
from jax.experimental.pallas import tpu as pltpu

_LANE = 128
_MAX_CHUNKS = 128                    # caps unrolled fold work per grid step
_PER_STEP_TARGET_BYTES = 4 << 20     # ~4 MiB of input per grid step (≈86% roofline)


# ---------------------------------------------------------------------------
# Sizing helpers
# ---------------------------------------------------------------------------
def _vmem_limit_bytes() -> int:
    """Half of physical VMEM, clamped: 32 MiB on v7x, 64 MiB on v5e/v6e."""
    try:
        cap = int(getattr(pltpu.get_tpu_info(), "vmem_capacity_bytes"))
    except Exception:  # query unavailable (old jax / interpret mode)
        cap = 96 << 20
    return int(min(max(cap // 2, 32 << 20), 64 << 20))


def _pick_row_block(nc: int) -> int:
    """Fixed row block (multiple of 8, <=128); cdiv grid bounds the partial block."""
    if nc <= 8:
        return nc
    rb = min(128, (nc // 8) * 8)
    # Prefer >= 2 row blocks so the "parallel" axis can shard across v7x's 2 TCs.
    if pl.cdiv(nc, rb) < 2:
        half = (((nc + 1) // 2) + 7) // 8 * 8
        rb = max(8, min(rb, half))
    return rb


def _pick_tile_s(s: int, row_block: int, stream_budget_bytes: int) -> int:
    """Streaming tile over the spatial (lane) axis."""
    # Whole spatial axis per step whenever the double-buffered footprint fits.
    if 2 * row_block * s * 4 <= stream_budget_bytes:
        return s
    budget_tile = stream_budget_bytes // (2 * row_block * 4)
    target_tile = max(_PER_STEP_TARGET_BYTES // (row_block * 4), _LANE)
    tile = min(budget_tile, target_tile, _LANE * _MAX_CHUNKS)
    tile = max(_LANE, (tile // _LANE) * _LANE)
    return min(tile, s)


# ---------------------------------------------------------------------------
# Kernel A: global max / sum pooling over the flattened spatial axis.
# ---------------------------------------------------------------------------
def _pool_kernel_single(fa_ref, max_ref, sum_ref):
    """num_s_tiles == 1: one step per row block, direct reduce, no scratch."""
    tile = fa_ref[...]                                   # (row_block, S)
    max_ref[...] = jnp.max(tile, axis=1, keepdims=True)
    sum_ref[...] = jnp.sum(tile, axis=1, keepdims=True)


def _make_pool_kernel_chunked(s_total: int, tile_s: int, num_s_tiles: int):
    """num_s_tiles > 1: VPU-only accumulation into (row_block, 128) scratch."""
    n_chunks = tile_s // _LANE
    needs_mask = (s_total % tile_s) != 0

    def fold(mx, sm, t_max, t_sum):
        for k in range(n_chunks):
            lo, hi = k * _LANE, (k + 1) * _LANE
            mx = jnp.maximum(mx, t_max[:, lo:hi])
            sm = sm + t_sum[:, lo:hi]
        return mx, sm

    def kernel(fa_ref, max_ref, sum_ref, mx_sc, sm_sc):
        t = pl.program_id(1)
        is_last = t == num_s_tiles - 1

        @pl.when(t == 0)
        def _init():
            mx_sc[...] = jnp.full(mx_sc.shape, -jnp.inf, mx_sc.dtype)
            sm_sc[...] = jnp.zeros(sm_sc.shape, sm_sc.dtype)

        tile = fa_ref[...]                               # (row_block, tile_s)

        if needs_mask:
            # Unmasked fast path for the steady state; mask only the last tile.
            @pl.when(jnp.logical_not(is_last))
            def _steady():
                mx, sm = fold(mx_sc[...], sm_sc[...], tile, tile)
                mx_sc[...] = mx
                sm_sc[...] = sm

            @pl.when(is_last)
            def _masked_tail():
                lane = jax.lax.broadcasted_iota(jnp.int32, tile.shape, 1)
                valid = (t * tile_s + lane) < s_total
                t_max = jnp.where(valid, tile, -jnp.inf)
                t_sum = jnp.where(valid, tile, 0.0)
                mx, sm = fold(mx_sc[...], sm_sc[...], t_max, t_sum)
                mx_sc[...] = mx
                sm_sc[...] = sm
        else:
            mx, sm = fold(mx_sc[...], sm_sc[...], tile, tile)
            mx_sc[...] = mx
            sm_sc[...] = sm

        @pl.when(is_last)
        def _finalize():
            # One cross-lane reduce + one 1-lane store per row block (not per step).
            max_ref[...] = jnp.max(mx_sc[...], axis=1, keepdims=True)
            sum_ref[...] = jnp.sum(sm_sc[...], axis=1, keepdims=True)

    return kernel


# ---------------------------------------------------------------------------
# Kernel B: tiny epilogue (fc1 + GELU + fc2 + softmax + bin centers).
# ---------------------------------------------------------------------------
_SQRT2_INV = 0.7071067811865476


def _erf_poly(x):
    """Abramowitz & Stegun 7.1.26 (|err| ~ 1.5e-7); elementwise ops only."""
    a1, a2, a3, a4, a5 = (0.254829592, -0.284496736, 1.421413741,
                          -1.453152027, 1.061405429)
    p = 0.3275911
    sign = jnp.where(x >= 0.0, 1.0, -1.0)
    ax = jnp.abs(x)
    t = 1.0 / (1.0 + p * ax)
    poly = ((((a5 * t + a4) * t + a3) * t + a2) * t + a1) * t
    return sign * (1.0 - poly * jnp.exp(-ax * ax))


def _gelu_exact(x):
    """nn.GELU() default (erf form)."""
    return 0.5 * x * (1.0 + _erf_poly(x * _SQRT2_INV))


def _make_epilogue_kernel(min_depth: float):
    def kernel(maxp_ref, sump_ref, w1m_ref, w1a_ref, b1_ref, w2_ref, b2_ref,
               mix_ref, out_ref):
        # fc1 without the lane-axis concat: max_pool @ W1_max + sum_pool @ W1_avg
        # (1/S of the mean is folded into W1_avg on the host).
        x = (jnp.dot(maxp_ref[...], w1m_ref[...], preferred_element_type=jnp.float32)
             + jnp.dot(sump_ref[...], w1a_ref[...], preferred_element_type=jnp.float32)
             + b1_ref[...])
        x = _gelu_exact(x)
        # Dropout(p=0.0) is the identity; omitted.
        x = jnp.dot(x, w2_ref[...], preferred_element_type=jnp.float32) + b2_ref[...]

        # Softmax over the bin axis (the module's extra bins/bins.sum() is a no-op).
        x = x - jnp.max(x, axis=1, keepdims=True)
        e = jnp.exp(x)
        bins = e / jnp.sum(e, axis=1, keepdims=True)

        # pad(min_depth) + cumsum + midpoint folded into a single matmul against a
        # host-precomputed matrix already scaled by (max_depth - min_depth):
        #   centers[:, j] = min_depth + sum_{k<j} widths[:, k] + 0.5 * widths[:, j]
        out_ref[...] = min_depth + jnp.dot(bins, mix_ref[...],
                                           preferred_element_type=jnp.float32)

    return kernel


# ---------------------------------------------------------------------------
# Wrapper
# ---------------------------------------------------------------------------
def bins_predict_forward(fa_nchw, w1, b1, w2, b2, *, max_depth, min_depth,
                         row_block=None, tile_s=None):
    """fa_nchw: (N, C, H, W) float32.  Weights are (in, out)-major.

    Returns centers of shape (N, OUT, 1, 1), matching the PyTorch module.
    """
    n, c, h, w = fa_nchw.shape
    s = h * w
    nc = n * c

    # TODO(synk): if the producer already emits bf16 activations, stream fa as
    # bf16 (f32 accumulate) to halve HBM traffic; a separate f32->bf16 cast
    # pass would cost more HBM traffic than it saves, so keep f32 here.
    fa2 = fa_nchw.reshape(nc, s).astype(jnp.float32)

    hidden = w1.shape[1]
    out_dim = w2.shape[1]

    # fc1 split (concat order in the module is [max_pool, avg_pool]); fold the
    # 1/S of the mean pooling into the avg half so the pool kernel only needs
    # a running sum.
    w1_max = w1[:c, :].astype(jnp.float32)
    w1_avg = w1[c:, :].astype(jnp.float32) * (1.0 / float(s))
    b1_2d = b1.reshape(1, hidden).astype(jnp.float32)
    w2_f = w2.astype(jnp.float32)
    b2_2d = b2.reshape(1, out_dim).astype(jnp.float32)

    # Precomputed "pad + cumsum + midpoint" matrix, pre-scaled by the depth range.
    k_idx = jnp.arange(out_dim)[:, None]
    j_idx = jnp.arange(out_dim)[None, :]
    mix = jnp.where(k_idx < j_idx, 1.0,
                    jnp.where(k_idx == j_idx, 0.5, 0.0)).astype(jnp.float32)
    mix = mix * (float(max_depth) - float(min_depth))

    # ---- pooling kernel sizing -------------------------------------------
    vmem_limit = _vmem_limit_bytes()
    stream_budget = vmem_limit - (8 << 20)   # headroom for scratch / compiler

    if row_block is None:
        row_block = _pick_row_block(nc)
    num_row_blocks = pl.cdiv(nc, row_block)
    if tile_s is None:
        tile_s = _pick_tile_s(s, row_block, stream_budget)
    tile_s = min(tile_s, s)
    num_s_tiles = pl.cdiv(s, tile_s)

    if num_s_tiles == 1:
        pool_kernel = _pool_kernel_single
        scratch_shapes = []
    else:
        pool_kernel = _make_pool_kernel_chunked(s, tile_s, num_s_tiles)
        scratch_shapes = [pltpu.VMEM((row_block, _LANE), jnp.float32),
                          pltpu.VMEM((row_block, _LANE), jnp.float32)]

    # NOTE: default double-buffering is kept; add pipeline_mode=pl.Buffered(3)
    # on the input spec only if a trace still shows exposed DMA.
    max_out, sum_out = pl.pallas_call(
        pool_kernel,
        grid=(num_row_blocks, num_s_tiles),
        out_shape=(jax.ShapeDtypeStruct((nc, 1), jnp.float32),
                   jax.ShapeDtypeStruct((nc, 1), jnp.float32)),
        in_specs=[pl.BlockSpec((row_block, tile_s), lambda r, t: (r, t))],
        out_specs=(pl.BlockSpec((row_block, 1), lambda r, t: (r, 0)),
                   pl.BlockSpec((row_block, 1), lambda r, t: (r, 0))),
        scratch_shapes=scratch_shapes,
        compiler_params=pltpu.CompilerParams(
            dimension_semantics=("parallel", "arbitrary"),
            vmem_limit_bytes=vmem_limit),
    )(fa2)

    # Tiny pooled stats: cheap XLA reshape, then the epilogue kernel.  The
    # second launch + round trip is a few microseconds of fixed latency and
    # only matters for tiny inputs.
    max_pool = max_out.reshape(n, c)
    sum_pool = sum_out.reshape(n, c)

    centers = pl.pallas_call(
        _make_epilogue_kernel(float(min_depth)),
        out_shape=jax.ShapeDtypeStruct((n, out_dim), jnp.float32),
        in_specs=[
            pl.BlockSpec((n, c), lambda: (0, 0)),
            pl.BlockSpec((n, c), lambda: (0, 0)),
            pl.BlockSpec(w1_max.shape, lambda: (0, 0)),
            pl.BlockSpec(w1_avg.shape, lambda: (0, 0)),
            pl.BlockSpec(b1_2d.shape, lambda: (0, 0)),
            pl.BlockSpec(w2_f.shape, lambda: (0, 0)),
            pl.BlockSpec(b2_2d.shape, lambda: (0, 0)),
            pl.BlockSpec(mix.shape, lambda: (0, 0)),
        ],
        out_specs=pl.BlockSpec((n, out_dim), lambda: (0, 0)),
    )(max_pool, sum_pool, w1_max, w1_avg, b1_2d, w2_f, b2_2d, mix)

    # Matches the PyTorch .view(n, dout, 1, 1).contiguous().
    return centers.reshape(n, out_dim, 1, 1)


# ---------------------------------------------------------------------------
# Pure-JAX reference mirroring the PyTorch forward exactly.
# ---------------------------------------------------------------------------
def reference_forward(fa_nchw, w1, b1, w2, b2, *, max_depth, min_depth):
    n, c, h, w = fa_nchw.shape
    flat = fa_nchw.reshape(n, c, h * w)
    max_pool = jnp.max(flat, axis=2)
    avg_pool = jnp.mean(flat, axis=2)
    pool = jnp.concatenate([max_pool, avg_pool], axis=1)
    x = pool @ w1 + b1
    x = jax.nn.gelu(x, approximate=False)          # nn.GELU() default (erf)
    x = x @ w2 + b2
    bins = jax.nn.softmax(x, axis=1)
    bins = bins / jnp.sum(bins, axis=1, keepdims=True)
    widths = (max_depth - min_depth) * bins
    widths = jnp.pad(widths, ((0, 0), (1, 0)), constant_values=min_depth)
    edges = jnp.cumsum(widths, axis=1)
    centers = 0.5 * (edges[:, :-1] + edges[:, 1:])
    return centers.reshape(n, -1, 1, 1)


if __name__ == "__main__":
    # Small shapes consistent with the module:
    #   in_channel=4 -> fc1 in_features = 8, hidden=32, out_channel=8,
    #   spatial 16x16, batch 2.
    N, C, H, W = 2, 4, 16, 16
    HIDDEN, OUT = 32, 8
    MAX_DEPTH, MIN_DEPTH = 10.0, 0.1

    key = jax.random.PRNGKey(0)
    k_fa, k_w1, k_b1, k_w2, k_b2 = jax.random.split(key, 5)

    fa = jax.random.normal(k_fa, (N, C, H, W), dtype=jnp.float32)
    # Deterministic synthetic parameters (fan-in scaled), weights stored (in, out).
    w1 = jax.random.normal(k_w1, (2 * C, HIDDEN), dtype=jnp.float32) * (1.0 / (2 * C) ** 0.5)
    b1 = jax.random.normal(k_b1, (HIDDEN,), dtype=jnp.float32) * 0.01
    w2 = jax.random.normal(k_w2, (HIDDEN, OUT), dtype=jnp.float32) * (1.0 / HIDDEN ** 0.5)
    b2 = jax.random.normal(k_b2, (OUT,), dtype=jnp.float32) * 0.01

    centers = bins_predict_forward(
        fa, w1, b1, w2, b2, max_depth=MAX_DEPTH, min_depth=MIN_DEPTH)
    centers = jax.block_until_ready(centers)

    ref = reference_forward(
        fa, w1, b1, w2, b2, max_depth=MAX_DEPTH, min_depth=MIN_DEPTH)

    assert centers.shape == (N, OUT, 1, 1), centers.shape
    assert jnp.allclose(centers, ref, atol=2e-4, rtol=1e-5), (
        "mismatch vs reference:\n%s\nvs\n%s" % (centers.ravel(), ref.ravel()))

    print("KERNEL_OK")
</pallas_src>

<mosaic_0001>
module attributes {stable_mosaic.version = 11 : i64} {
  func.func @_pool_kernel_single(%arg0: i32, %arg1: i32, %arg2: memref<8x256xf32, #tpu.memory_space<vmem>>, %arg3: memref<8x1xf32, #tpu.memory_space<vmem>>, %arg4: memref<8x1xf32, #tpu.memory_space<vmem>>) attributes {dimension_semantics = [#tpu.dimension_semantics<parallel>, #tpu.dimension_semantics<arbitrary>], iteration_bounds = array<i64: 1, 1>, scalar_prefetch = 0 : i64, scratch_operands = 0 : i64, tpu.core_type = #tpu.core_type<tc>, window_params = [{transform_indices = @transform_0, window_bounds = array<i64: 8, 256>}, {transform_indices = @transform_1, window_bounds = array<i64: 8, 1>}, {transform_indices = @transform_2, window_bounds = array<i64: 8, 1>}]} {
    %c0 = arith.constant 0 : index
    %c0_0 = arith.constant 0 : index
    %0 = vector.load %arg2[%c0, %c0_0] : memref<8x256xf32, #tpu.memory_space<vmem>>, vector<8x256xf32>
    %cst = arith.constant dense<0xFF800000> : vector<8xf32>
    %1 = vector.multi_reduction <maximumf>, %0, %cst [1] : vector<8x256xf32> to vector<8xf32>
    %2 = vector.shape_cast %1 : vector<8xf32> to vector<8x1xf32>
    %c0_1 = arith.constant 0 : index
    %c0_2 = arith.constant 0 : index
    %3 = vector.load %arg3[%c0_1, %c0_2] : memref<8x1xf32, #tpu.memory_space<vmem>>, vector<8x1xf32>
    tpu.vector_store %arg3[%c0_1, %c0_2], %2 {strides = array<i32>} : memref<8x1xf32, #tpu.memory_space<vmem>>, vector<8x1xf32>,
    %cst_3 = arith.constant dense<0.000000e+00> : vector<8xf32>
    %4 = vector.multi_reduction <add>, %0, %cst_3 [1] : vector<8x256xf32> to vector<8xf32>
    %5 = vector.shape_cast %4 : vector<8xf32> to vector<8x1xf32>
    %c0_4 = arith.constant 0 : index
    %c0_5 = arith.constant 0 : index
    %6 = vector.load %arg4[%c0_4, %c0_5] : memref<8x1xf32, #tpu.memory_space<vmem>>, vector<8x1xf32>
    tpu.vector_store %arg4[%c0_4, %c0_5], %5 {strides = array<i32>} : memref<8x1xf32, #tpu.memory_space<vmem>>, vector<8x1xf32>,
    return
  }
  func.func @transform_0(%arg0: i32, %arg1: i32) -> (i32, i32) {
    %c0_i32 = arith.constant 0 : i32
    return %arg0, %arg1 : i32, i32
  }
  func.func @transform_1(%arg0: i32, %arg1: i32) -> (i32, i32) {
    %c0_i32 = arith.constant 0 : i32
    %c0_i32_0 = arith.constant 0 : i32
    return %arg0, %c0_i32 : i32, i32
  }
  func.func @transform_2(%arg0: i32, %arg1: i32) -> (i32, i32) {
    %c0_i32 = arith.constant 0 : i32
    %c0_i32_0 = arith.constant 0 : i32
    return %arg0, %c0_i32 : i32, i32
  }
}

</mosaic_0001>

<llo_original>
// kernel: tpu_custom_call.1
$region0: #{tpu_custom_call.1}
  #allocation0 [shape = 'u32[]', space=smem, size = 0x4, offset = 0x4, fixed_abs, tag = 'smem constant byte address 0x4 - core index']
  #allocation1 [shape = 'u32[72,128]{1,0:T(1,128)}', space=vmem, size = 0x9000, scoped, tag = 'internal scratch']
  %s0 = inlined_call_operand.hbm [shape: f32[8,256], index: 0, kind: input, shape index: {}]
  %s1 = inlined_call_operand.vmem [shape: f32[8,1], index: 1, kind: output, shape index: {0}]
  %s2 = inlined_call_operand.vmem [shape: f32[8,1], index: 2, kind: output, shape index: {1}]
  %3 = xla_tuple %s1, %s2
  %s4 = sld [smem:[#allocation0]]
  $region26: #{tpu_custom_call.1} parent=0
    _
  %s6 = ssub.s32 1, %s4
  %s7 = scalar_select 0, %s6, %s4
  $region1: #{tpu_custom_call.1} parent=0
    #allocation2 [shape = 'u8[8192]{0}', space=vmem, size = 0x2000, scoped, tag = 'input window, operand 0, single buffered']
    #allocation3 [shape = 's32[1]{0}', space=sflag, size = 0x4, scoped, tag = 'scoped memory for tpu_custom_call.1']
    %8 = vsyncpa [#allocation3], 0
    // Predicated region
    $region2: #{tpu_custom_call.1} parent=1 // pred_check
      _
    $region3: #{tpu_custom_call.1} parent=1 // pred_check_branch
      %10 = sbr.rel (0) target = $region5
    $region4: #{tpu_custom_call.1} parent=1 // pred_region
      %12 = vsyncadd [#allocation3], 0
      %s14 = sshll.u32 %s0, 4
      %s15 = int_to_ptr.hbm [resolvable:$true] %s14
      %s16 = sshll.u32 [#allocation2], 4
      %s17 = int_to_ptr.vmem [resolvable:$true] %s16
      %19 = dma.hbm_to_vmem [thread:$0]  %s15, 256, %s17, [#allocation3]
    $region5: #{tpu_custom_call.1} parent=1 // pred_fallthru
      _
    // Predicated region
    $region6: #{tpu_custom_call.1} parent=1 // pred_check
      _
    $region7: #{tpu_custom_call.1} parent=1 // pred_check_branch
      %21 = sbr.rel (0) target = $region9
    $region8: #{tpu_custom_call.1} parent=1 // pred_region
      %23 = dma.done [#allocation3], 256
    $region9: #{tpu_custom_call.1} parent=1 // pred_fallthru
      _
    %v24 = vld [vmem:[#allocation2] sm:$0xff]
    %v25 = vld [vmem:[#allocation2 + $0x8] sm:$0xff]
    %v26 = vmax.f32 %v24, %v25
    %27 = vmax.xlane.f32.xlu0 %v26
    %v28 = vpop.xlane.xlu0 %27
    %vm29 = vcmask 7168
    %30 = vst.msk [vmem:[%s1] sm:$0xff] %vm29, %v28
    %v31 = vadd.f32 %v24, %v25
    %32 = vadd.xlane.f32.xlu0 %v31
    %v33 = vpop.xlane.xlu0 %32
    %34 = vst.msk [vmem:[%s2] sm:$0xff] %vm29, %v33
    // Predicated region
    $region10: #{tpu_custom_call.1} parent=1 // pred_check
      _
    $region11: #{tpu_custom_call.1} parent=1 // pred_check_branch
      %36 = sbr.rel (0) target = $region13
    $region12: #{tpu_custom_call.1} parent=1 // pred_region
      _
    $region13: #{tpu_custom_call.1} parent=1 // pred_fallthru
      _
    // Predicated region
    $region14: #{tpu_custom_call.1} parent=1 // pred_check
      _
    $region15: #{tpu_custom_call.1} parent=1 // pred_check_branch
      %38 = sbr.rel (0) target = $region17
    $region16: #{tpu_custom_call.1} parent=1 // pred_region
      _
    $region17: #{tpu_custom_call.1} parent=1 // pred_fallthru
      _
    // Predicated region
    $region18: #{tpu_custom_call.1} parent=1 // pred_check
      _
    $region19: #{tpu_custom_call.1} parent=1 // pred_check_branch
      %40 = sbr.rel (0) target = $region21
    $region20: #{tpu_custom_call.1} parent=1 // pred_region
      _
    $region21: #{tpu_custom_call.1} parent=1 // pred_fallthru
      _
    // Predicated region
    $region22: #{tpu_custom_call.1} parent=1 // pred_check
      _
    $region23: #{tpu_custom_call.1} parent=1 // pred_check_branch
      %42 = sbr.rel (0) target = $region25
    $region24: #{tpu_custom_call.1} parent=1 // pred_region
      _
    $region25: #{tpu_custom_call.1} parent=1 // pred_fallthru
      _
    %43 = vsyncpa [#allocation3], 1

</llo_original>
